<compile_context>
chip_gen: v7x
topology: tpu7x:2x2x1
jax: 0.10.0
libtpu: 0.0.40
codegen_flags: <defaults>
</compile_context>

<pallas_src>
import functools

import jax
import jax.numpy as jnp
from jax.experimental import pallas as pl
from jax.experimental.pallas import tpu as pltpu


def _round_up(v, m):
    return ((v + m - 1) // m) * m


def actor_kernel(x_ref, w1_ref, b1_ref, w2_ref, b2_ref, wh_ref, bh_ref,
                 mean_ref, logstd_ref, *, scale, offset, action_dim, mm_dtype):
    # In-kernel cast of x to the matmul operand dtype (no wrapper-side copy).
    x = x_ref[...].astype(mm_dtype)

    # actor_public: Linear + ReLU, Linear + ReLU.
    # MXU matmuls with f32 accumulation; all elementwise work stays f32.
    h1 = jnp.dot(x, w1_ref[...], preferred_element_type=jnp.float32) + b1_ref[...]
    h1 = jnp.maximum(h1, 0.0)
    h2 = jnp.dot(h1.astype(mm_dtype), w2_ref[...],
                 preferred_element_type=jnp.float32) + b2_ref[...]
    h2 = jnp.maximum(h2, 0.0)

    # Fused heads: one lane-dense (hidden, n_pad) matmul.  Columns [0, A) are
    # the mean head, [A, 2A) the logstd head, the rest zero padding.
    heads = jnp.dot(h2.astype(mm_dtype), wh_ref[...],
                    preferred_element_type=jnp.float32) + bh_ref[...]

    mean = heads[:, :action_dim]
    z = heads[:, action_dim:2 * action_dim]
    # logstd = logstd_min + 0.5*(max-min)*(tanh(z)+1) == offset + scale*tanh(z)
    logstd = offset + scale * jnp.tanh(z)

    mean_ref[...] = mean.astype(mean_ref.dtype)
    logstd_ref[...] = logstd.astype(logstd_ref.dtype)


def prepare_actor_params(params, *, use_bf16=True):
    """One-time parameter preparation (call at init, NOT per forward step).

    Fuses + lane-pads the mean/logstd heads into a single (hidden, n_pad)
    weight and casts the matmul operands to bf16 (default) so the per-call
    path is exactly one pallas_call with no auxiliary XLA ops.
    """
    w1, b1, w2, b2, wm, bm, ws, bs = params
    latent, hidden = w1.shape
    A = wm.shape[1]
    n_pad = max(128, _round_up(2 * A, 128))

    wh = (jnp.zeros((hidden, n_pad), jnp.float32)
          .at[:, :A].set(wm).at[:, A:2 * A].set(ws))
    bh = (jnp.zeros((1, n_pad), jnp.float32)
          .at[:, :A].set(bm).at[:, A:2 * A].set(bs))

    mm_dtype = jnp.bfloat16 if use_bf16 else jnp.float32
    return dict(
        w1=w1.astype(mm_dtype), b1=b1,
        w2=w2.astype(mm_dtype), b2=b2,
        wh=wh.astype(mm_dtype), bh=bh,
        latent=latent, hidden=hidden, action_dim=A, n_pad=n_pad,
        mm_dtype=mm_dtype,
    )


def _choose_tm(B, block_rows):
    # Small batches (latency path): single grid step covering the whole batch.
    if B <= 512:
        return B
    # Larger batches: guarantee >= 2 grid steps so the "parallel" batch axis
    # can shard across v7x's two TensorCores; cap the per-step tile to bound
    # VMEM (v7x has 64 MiB total, v5e a 16 MiB default scoped limit).
    return min(block_rows, _round_up(-(-B // 2), 8))


def actor_forward(x, prep, logstd_min=-5.0, logstd_max=2.0, *, block_rows=2048):
    """x: (B, latent_dim) f32, prep: prepare_actor_params output.
    Returns (mean, logstd), each (B, action_dim) f32."""
    B, latent = x.shape
    assert latent == prep["latent"]
    hidden = prep["hidden"]
    A = prep["action_dim"]
    n_pad = prep["n_pad"]
    mm_dtype = prep["mm_dtype"]

    tm = _choose_tm(B, block_rows)
    grid = (pl.cdiv(B, tm),)

    scale = 0.5 * (logstd_max - logstd_min)
    offset = logstd_min + scale

    kernel = functools.partial(actor_kernel, scale=scale, offset=offset,
                               action_dim=A, mm_dtype=mm_dtype)

    const = lambda shape: pl.BlockSpec(shape, lambda i: (0, 0))

    itm = jnp.dtype(mm_dtype).itemsize
    cost = pl.CostEstimate(
        flops=2 * B * (latent * hidden + hidden * hidden + hidden * n_pad),
        transcendentals=B * A,
        bytes_accessed=(B * latent * 4                                   # x (f32 in)
                        + (latent * hidden + hidden * hidden
                           + hidden * n_pad) * itm                      # weights
                        + (2 * hidden + n_pad) * 4                      # biases
                        + 2 * B * A * 4),                               # mean+logstd out
    )

    mean, logstd = pl.pallas_call(
        kernel,
        out_shape=(jax.ShapeDtypeStruct((B, A), jnp.float32),
                   jax.ShapeDtypeStruct((B, A), jnp.float32)),
        grid=grid,
        in_specs=[
            pl.BlockSpec((tm, latent), lambda i: (i, 0)),   # x: tiled over batch
            const((latent, hidden)),                        # w1 (VMEM-resident)
            const((1, hidden)),                             # b1
            const((hidden, hidden)),                        # w2
            const((1, hidden)),                             # b2
            const((hidden, n_pad)),                         # fused head weight
            const((1, n_pad)),                              # fused head bias
        ],
        out_specs=(pl.BlockSpec((tm, A), lambda i: (i, 0)),  # mean
                   pl.BlockSpec((tm, A), lambda i: (i, 0))), # logstd
        compiler_params=pltpu.CompilerParams(
            dimension_semantics=("parallel",),
            vmem_limit_bytes=32 * 1024 * 1024),
        cost_estimate=cost,
    )(x, prep["w1"], prep["b1"], prep["w2"], prep["b2"], prep["wh"], prep["bh"])

    return mean, logstd


def init_params(key, latent_dim, hidden, action_dim):
    """Deterministic init mimicking PyTorch Linear default (uniform ±1/sqrt(fan_in)).
    Weights are stored transposed: (in, out)."""
    def linear(k, fan_in, fan_out):
        kw, kb = jax.random.split(k)
        bound = 1.0 / jnp.sqrt(fan_in)
        w = jax.random.uniform(kw, (fan_in, fan_out), jnp.float32, -bound, bound)
        b = jax.random.uniform(kb, (1, fan_out), jnp.float32, -bound, bound)
        return w, b

    k1, k2, k3, k4 = jax.random.split(key, 4)
    w1, b1 = linear(k1, latent_dim, hidden)
    w2, b2 = linear(k2, hidden, hidden)
    wm, bm = linear(k3, hidden, action_dim)
    ws, bs = linear(k4, hidden, action_dim)
    return (w1, b1, w2, b2, wm, bm, ws, bs)


def actor_forward_ref(x, params, logstd_min=-5.0, logstd_max=2.0):
    w1, b1, w2, b2, wm, bm, ws, bs = params
    h = jnp.maximum(x @ w1 + b1, 0.0)
    h = jnp.maximum(h @ w2 + b2, 0.0)
    mean = h @ wm + bm
    logstd = logstd_min + 0.5 * (logstd_max - logstd_min) * (jnp.tanh(h @ ws + bs) + 1.0)
    return mean, logstd


if __name__ == "__main__":
    latent_dim, hidden, action_dim, batch = 32, 256, 8, 8

    key = jax.random.PRNGKey(0)
    kx, kp = jax.random.split(key)
    x = jax.random.normal(kx, (batch, latent_dim), jnp.float32)
    params = init_params(kp, latent_dim, hidden, action_dim)

    mean_ref, logstd_ref = actor_forward_ref(x, params)

    # f32-operand path: tight tolerance against the pure-JAX reference.
    prep_f32 = prepare_actor_params(params, use_bf16=False)
    mean, logstd = actor_forward(x, prep_f32)
    jax.block_until_ready((mean, logstd))
    assert mean.shape == (batch, action_dim) and logstd.shape == (batch, action_dim)
    assert jnp.allclose(mean, mean_ref, atol=1e-4, rtol=1e-4)
    assert jnp.allclose(logstd, logstd_ref, atol=1e-4, rtol=1e-4)

    # Default fast path: bf16 MXU operands (f32 accumulate/epilogue), all gens.
    prep = prepare_actor_params(params)
    mean_bf, logstd_bf = actor_forward(x, prep)
    jax.block_until_ready((mean_bf, logstd_bf))
    assert mean_bf.shape == (batch, action_dim) and logstd_bf.shape == (batch, action_dim)
    assert jnp.allclose(mean_bf, mean_ref, atol=5e-2, rtol=5e-2)
    assert jnp.allclose(logstd_bf, logstd_ref, atol=5e-2, rtol=5e-2)

    print("KERNEL_OK")
</pallas_src>

<mosaic_0001>
module attributes {stable_mosaic.version = 11 : i64} {
  func.func @actor_kernel(%arg0: i32, %arg1: memref<8x32xf32, #tpu.memory_space<vmem>>, %arg2: memref<32x256xf32, #tpu.memory_space<vmem>>, %arg3: memref<1x256xf32, #tpu.memory_space<vmem>>, %arg4: memref<256x256xf32, #tpu.memory_space<vmem>>, %arg5: memref<1x256xf32, #tpu.memory_space<vmem>>, %arg6: memref<256x128xf32, #tpu.memory_space<vmem>>, %arg7: memref<1x128xf32, #tpu.memory_space<vmem>>, %arg8: memref<8x8xf32, #tpu.memory_space<vmem>>, %arg9: memref<8x8xf32, #tpu.memory_space<vmem>>) attributes {dimension_semantics = [#tpu.dimension_semantics<parallel>], iteration_bounds = array<i64: 1>, scalar_prefetch = 0 : i64, scratch_operands = 0 : i64, tpu.core_type = #tpu.core_type<tc>, window_params = [{transform_indices = @transform_0, window_bounds = array<i64: 8, 32>}, {pipeline_mode = #tpu.pipeline_mode<synchronous>, transform_indices = @transform_1, window_bounds = array<i64: 32, 256>}, {pipeline_mode = #tpu.pipeline_mode<synchronous>, transform_indices = @transform_2, window_bounds = array<i64: 1, 256>}, {pipeline_mode = #tpu.pipeline_mode<synchronous>, transform_indices = @transform_3, window_bounds = array<i64: 256, 256>}, {pipeline_mode = #tpu.pipeline_mode<synchronous>, transform_indices = @transform_4, window_bounds = array<i64: 1, 256>}, {pipeline_mode = #tpu.pipeline_mode<synchronous>, transform_indices = @transform_5, window_bounds = array<i64: 256, 128>}, {pipeline_mode = #tpu.pipeline_mode<synchronous>, transform_indices = @transform_6, window_bounds = array<i64: 1, 128>}, {transform_indices = @transform_7, window_bounds = array<i64: 8, 8>}, {transform_indices = @transform_8, window_bounds = array<i64: 8, 8>}]} {
    %c0 = arith.constant 0 : index
    %c0_0 = arith.constant 0 : index
    %0 = vector.load %arg1[%c0, %c0_0] : memref<8x32xf32, #tpu.memory_space<vmem>>, vector<8x32xf32>
    %c0_1 = arith.constant 0 : index
    %c0_2 = arith.constant 0 : index
    %1 = vector.load %arg2[%c0_1, %c0_2] : memref<32x256xf32, #tpu.memory_space<vmem>>, vector<32x256xf32>
    %cst = arith.constant dense<0.000000e+00> : vector<8x256xf32>
    %2 = tpu.matmul %0, %1, %cst {dimension_numbers = #tpu.dot_dimension_numbers<[1], [0], [0], [1], [0, 0, 1, 1], [], []>} : vector<8x32xf32>, vector<32x256xf32>, vector<8x256xf32> -> vector<8x256xf32>
    %c0_3 = arith.constant 0 : index
    %c0_4 = arith.constant 0 : index
    %3 = vector.load %arg3[%c0_3, %c0_4] : memref<1x256xf32, #tpu.memory_space<vmem>>, vector<1x256xf32>
    %4 = vector.broadcast %3 : vector<1x256xf32> to vector<8x256xf32>
    %5 = arith.addf %2, %4 : vector<8x256xf32>
    %cst_5 = arith.constant 0.000000e+00 : f32
    %6 = vector.broadcast %cst_5 : f32 to vector<8x256xf32>
    %7 = arith.maximumf %5, %6 : vector<8x256xf32>
    %c0_6 = arith.constant 0 : index
    %c0_7 = arith.constant 0 : index
    %8 = vector.load %arg4[%c0_6, %c0_7] : memref<256x256xf32, #tpu.memory_space<vmem>>, vector<256x256xf32>
    %cst_8 = arith.constant dense<0.000000e+00> : vector<8x256xf32>
    %9 = tpu.matmul %7, %8, %cst_8 {dimension_numbers = #tpu.dot_dimension_numbers<[1], [0], [0], [1], [0, 0, 1, 1], [], []>} : vector<8x256xf32>, vector<256x256xf32>, vector<8x256xf32> -> vector<8x256xf32>
    %c0_9 = arith.constant 0 : index
    %c0_10 = arith.constant 0 : index
    %10 = vector.load %arg5[%c0_9, %c0_10] : memref<1x256xf32, #tpu.memory_space<vmem>>, vector<1x256xf32>
    %11 = vector.broadcast %10 : vector<1x256xf32> to vector<8x256xf32>
    %12 = arith.addf %9, %11 : vector<8x256xf32>
    %cst_11 = arith.constant 0.000000e+00 : f32
    %13 = vector.broadcast %cst_11 : f32 to vector<8x256xf32>
    %14 = arith.maximumf %12, %13 : vector<8x256xf32>
    %c0_12 = arith.constant 0 : index
    %c0_13 = arith.constant 0 : index
    %15 = vector.load %arg6[%c0_12, %c0_13] : memref<256x128xf32, #tpu.memory_space<vmem>>, vector<256x128xf32>
    %cst_14 = arith.constant dense<0.000000e+00> : vector<8x128xf32>
    %16 = tpu.matmul %14, %15, %cst_14 {dimension_numbers = #tpu.dot_dimension_numbers<[1], [0], [0], [1], [0, 0, 1, 1], [], []>} : vector<8x256xf32>, vector<256x128xf32>, vector<8x128xf32> -> vector<8x128xf32>
    %c0_15 = arith.constant 0 : index
    %c0_16 = arith.constant 0 : index
    %17 = vector.load %arg7[%c0_15, %c0_16] : memref<1x128xf32, #tpu.memory_space<vmem>>, vector<1x128xf32>
    %18 = vector.broadcast %17 : vector<1x128xf32> to vector<8x128xf32>
    %19 = arith.addf %16, %18 : vector<8x128xf32>
    %20 = vector.extract_strided_slice %19 {offsets = [0, 0], sizes = [8, 8], strides = [1, 1]} : vector<8x128xf32> to vector<8x8xf32>
    %21 = vector.extract_strided_slice %19 {offsets = [0, 8], sizes = [8, 8], strides = [1, 1]} : vector<8x128xf32> to vector<8x8xf32>
    %22 = math.tanh %21 : vector<8x8xf32>
    %cst_17 = arith.constant 3.500000e+00 : f32
    %23 = vector.broadcast %cst_17 : f32 to vector<8x8xf32>
    %24 = arith.mulf %23, %22 : vector<8x8xf32>
    %cst_18 = arith.constant -1.500000e+00 : f32
    %25 = vector.broadcast %cst_18 : f32 to vector<8x8xf32>
    %26 = arith.addf %25, %24 : vector<8x8xf32>
    %c0_19 = arith.constant 0 : index
    %c0_20 = arith.constant 0 : index
    %27 = vector.load %arg8[%c0_19, %c0_20] : memref<8x8xf32, #tpu.memory_space<vmem>>, vector<8x8xf32>
    tpu.vector_store %arg8[%c0_19, %c0_20], %20 {strides = array<i32>} : memref<8x8xf32, #tpu.memory_space<vmem>>, vector<8x8xf32>,
    %c0_21 = arith.constant 0 : index
    %c0_22 = arith.constant 0 : index
    %28 = vector.load %arg9[%c0_21, %c0_22] : memref<8x8xf32, #tpu.memory_space<vmem>>, vector<8x8xf32>
    tpu.vector_store %arg9[%c0_21, %c0_22], %26 {strides = array<i32>} : memref<8x8xf32, #tpu.memory_space<vmem>>, vector<8x8xf32>,
    return
  }
  func.func @transform_0(%arg0: i32) -> (i32, i32) {
    %c0_i32 = arith.constant 0 : i32
    %c0_i32_0 = arith.constant 0 : i32
    return %arg0, %c0_i32 : i32, i32
  }
  func.func @transform_1(%arg0: i32) -> (i32, i32) {
    %c0_i32 = arith.constant 0 : i32
    %c0_i32_0 = arith.constant 0 : i32
    %c0_i32_1 = arith.constant 0 : i32
    return %c0_i32, %c0_i32_0 : i32, i32
  }
  func.func @transform_2(%arg0: i32) -> (i32, i32) {
    %c0_i32 = arith.constant 0 : i32
    %c0_i32_0 = arith.constant 0 : i32
    %c0_i32_1 = arith.constant 0 : i32
    return %c0_i32, %c0_i32_0 : i32, i32
  }
  func.func @transform_3(%arg0: i32) -> (i32, i32) {
    %c0_i32 = arith.constant 0 : i32
    %c0_i32_0 = arith.constant 0 : i32
    %c0_i32_1 = arith.constant 0 : i32
    return %c0_i32, %c0_i32_0 : i32, i32
  }
  func.func @transform_4(%arg0: i32) -> (i32, i32) {
    %c0_i32 = arith.constant 0 : i32
    %c0_i32_0 = arith.constant 0 : i32
    %c0_i32_1 = arith.constant 0 : i32
    return %c0_i32, %c0_i32_0 : i32, i32
  }
  func.func @transform_5(%arg0: i32) -> (i32, i32) {
    %c0_i32 = arith.constant 0 : i32
    %c0_i32_0 = arith.constant 0 : i32
    %c0_i32_1 = arith.constant 0 : i32
    return %c0_i32, %c0_i32_0 : i32, i32
  }
  func.func @transform_6(%arg0: i32) -> (i32, i32) {
    %c0_i32 = arith.constant 0 : i32
    %c0_i32_0 = arith.constant 0 : i32
    %c0_i32_1 = arith.constant 0 : i32
    return %c0_i32, %c0_i32_0 : i32, i32
  }
  func.func @transform_7(%arg0: i32) -> (i32, i32) {
    %c0_i32 = arith.constant 0 : i32
    %c0_i32_0 = arith.constant 0 : i32
    return %arg0, %c0_i32 : i32, i32
  }
  func.func @transform_8(%arg0: i32) -> (i32, i32) {
    %c0_i32 = arith.constant 0 : i32
    %c0_i32_0 = arith.constant 0 : i32
    return %arg0, %c0_i32 : i32, i32
  }
}

</mosaic_0001>

<llo_original>
// kernel: tpu_custom_call.1
$region0: #{tpu_custom_call.1}
  #allocation0 [shape = 'u32[]', space=smem, size = 0x4, offset = 0x4, fixed_abs, tag = 'smem constant byte address 0x4 - core index']
  #allocation1 [shape = 'u32[144,128]{1,0:T(1,128)}', space=vmem, size = 0x12000, scoped, tag = 'internal scratch']
  %s0 = inlined_call_operand.hbm [shape: f32[8,32], index: 0, kind: input, shape index: {}]
  %s1 = inlined_call_operand.hbm [shape: f32[32,256], index: 1, kind: input, shape index: {}]
  %s2 = inlined_call_operand.vmem [shape: f32[1,256], index: 2, kind: input, shape index: {}]
  %s3 = inlined_call_operand.hbm [shape: f32[256,256], index: 3, kind: input, shape index: {}]
  %s4 = inlined_call_operand.vmem [shape: f32[1,256], index: 4, kind: input, shape index: {}]
  %s5 = inlined_call_operand.hbm [shape: f32[256,128], index: 5, kind: input, shape index: {}]
  %s6 = inlined_call_operand.vmem [shape: f32[1,128], index: 6, kind: input, shape index: {}]
  %s7 = inlined_call_operand.hbm [shape: f32[8,8], index: 7, kind: output, shape index: {0}]
  %s8 = inlined_call_operand.hbm [shape: f32[8,8], index: 8, kind: output, shape index: {1}]
  %9 = xla_tuple %s7, %s8
  %s10 = sld [smem:[#allocation0]]
  $region62: #{tpu_custom_call.1} parent=0
    _
  %s12 = ssub.s32 1, %s10
  %s13 = scalar_select 0, %s12, %s10
  $region1: #{tpu_custom_call.1} parent=0
    #allocation2 [shape = 'u8[4096]{0}', space=vmem, size = 0x1000, scoped, tag = 'input window, operand 0, single buffered']
    #allocation3 [shape = 's32[1]{0}', space=sflag, size = 0x4, scoped, tag = 'scoped memory for tpu_custom_call.1']
    #allocation4 [shape = 's32[1]{0}', space=sflag, size = 0x4, scoped, tag = 'scoped memory for tpu_custom_call.1']
    #allocation5 [shape = 'u8[32768]{0}', space=vmem, size = 0x8000, scoped, tag = 'input window, operand 1, single buffered']
    #allocation6 [shape = 's32[1]{0}', space=sflag, size = 0x4, scoped, tag = 'scoped memory for tpu_custom_call.1']
    #allocation7 [shape = 'u8[262144]{0}', space=vmem, size = 0x40000, scoped, tag = 'input window, operand 3, single buffered']
    #allocation8 [shape = 'u8[131072]{0}', space=vmem, size = 0x20000, scoped, tag = 'input window, operand 5, single buffered']
    #allocation9 [shape = 's32[1]{0}', space=sflag, size = 0x4, scoped, tag = 'scoped memory for tpu_custom_call.1']
    #allocation10 [shape = 'u8[4096]{0}', space=vmem, size = 0x1000, scoped, tag = 'output window, operand 0, single buffered']
    #allocation11 [shape = 'u8[4096]{0}', space=vmem, size = 0x1000, scoped, tag = 'output window, operand 1, single buffered']
    #allocation12 [shape = 's32[1]{0}', space=sflag, size = 0x4, scoped, tag = 'scoped memory for tpu_custom_call.1']
    %14 = vsyncpa [#allocation3], 0
    %15 = vsyncpa [#allocation6], 0
    %16 = vsyncpa [#allocation9], 0
    %17 = vsyncpa [#allocation4], 0
    %18 = vsyncpa [#allocation12], 0
    // Predicated region
    $region2: #{tpu_custom_call.1} parent=1 // pred_check
      _
    $region3: #{tpu_custom_call.1} parent=1 // pred_check_branch
      %20 = sbr.rel (0) target = $region5
    $region4: #{tpu_custom_call.1} parent=1 // pred_region
      %s22 = ssub.s32 128, 128
      %23 = vsyncadd [#allocation3], %s22
      %s25 = sshll.u32 [#allocation2], 4
      %s26 = int_to_ptr.vmem [resolvable:$true] %s25
      %28 = dma.hbm_to_vmem [thread:$0]  %s0, 128, %s26, [#allocation3]
    $region5: #{tpu_custom_call.1} parent=1 // pred_fallthru
      _
    // Predicated region
    $region6: #{tpu_custom_call.1} parent=1 // pred_check
      _
    $region7: #{tpu_custom_call.1} parent=1 // pred_check_branch
      %30 = sbr.rel (0) target = $region9
    $region8: #{tpu_custom_call.1} parent=1 // pred_region
      %s32 = ssub.s32 1024, 1024
      %33 = vsyncadd [#allocation6], %s32
      %s34 = sshll.u32 [#allocation5], 4
      %s35 = int_to_ptr.vmem [resolvable:$true] %s34
      %40 = dma.hbm_to_vmem [thread:$0]  %s1, 1024, %s35, [#allocation6], 256, 256, 16
    $region9: #{tpu_custom_call.1} parent=1 // pred_fallthru
      _
    // Predicated region
    $region10: #{tpu_custom_call.1} parent=1 // pred_check
      _
    $region11: #{tpu_custom_call.1} parent=1 // pred_check_branch
      %42 = sbr.rel (0) target = $region13
    $region12: #{tpu_custom_call.1} parent=1 // pred_region
      _
    $region13: #{tpu_custom_call.1} parent=1 // pred_fallthru
      _
    // Predicated region
    $region14: #{tpu_custom_call.1} parent=1 // pred_check
      _
    $region15: #{tpu_custom_call.1} parent=1 // pred_check_branch
      %44 = sbr.rel (0) target = $region17
    $region16: #{tpu_custom_call.1} parent=1 // pred_region
      %s46 = ssub.s32 8192, 8192
      %47 = vsyncadd [#allocation6], %s46
      %s48 = sshll.u32 [#allocation7], 4
      %s49 = int_to_ptr.vmem [resolvable:$true] %s48
      %54 = dma.hbm_to_vmem [thread:$0]  %s3, 8192, %s49, [#allocation6], 256, 256, 16
    $region17: #{tpu_custom_call.1} parent=1 // pred_fallthru
      _
    // Predicated region
    $region18: #{tpu_custom_call.1} parent=1 // pred_check
      _
    $region19: #{tpu_custom_call.1} parent=1 // pred_check_branch
      %56 = sbr.rel (0) target = $region21
    $region20: #{tpu_custom_call.1} parent=1 // pred_region
      _
    $region21: #{tpu_custom_call.1} parent=1 // pred_fallthru
      _
    // Predicated region
    $region22: #{tpu_custom_call.1} parent=1 // pred_check
      _
    $region23: #{tpu_custom_call.1} parent=1 // pred_check_branch
      %58 = sbr.rel (0) target = $region25
    $region24: #{tpu_custom_call.1} parent=1 // pred_region
      %s60 = ssub.s32 4096, 4096
      %61 = vsyncadd [#allocation9], %s60
      %s62 = sshll.u32 [#allocation8], 4
      %s63 = int_to_ptr.vmem [resolvable:$true] %s62
      %68 = dma.hbm_to_vmem [thread:$0]  %s5, 4096, %s63, [#allocation9], 128, 128, 8
    $region25: #{tpu_custom_call.1} parent=1 // pred_fallthru
      _
    // Predicated region
    $region26: #{tpu_custom_call.1} parent=1 // pred_check
      _
    $region27: #{tpu_custom_call.1} parent=1 // pred_check_branch
      %70 = sbr.rel (0) target = $region29
    $region28: #{tpu_custom_call.1} parent=1 // pred_region
      _
    $region29: #{tpu_custom_call.1} parent=1 // pred_fallthru
      _
    // Predicated region
    $region30: #{tpu_custom_call.1} parent=1 // pred_check
      _
    $region31: #{tpu_custom_call.1} parent=1 // pred_check_branch
      %72 = sbr.rel (0) target = $region33
    $region32: #{tpu_custom_call.1} parent=1 // pred_region
      %73 = dma.done [#allocation3], 128
    $region33: #{tpu_custom_call.1} parent=1 // pred_fallthru
      _
    // Predicated region
    $region34: #{tpu_custom_call.1} parent=1 // pred_check
      _
    $region35: #{tpu_custom_call.1} parent=1 // pred_check_branch
      %75 = sbr.rel (0) target = $region37
    $region36: #{tpu_custom_call.1} parent=1 // pred_region
      %76 = dma.done [#allocation6], 1024
    $region37: #{tpu_custom_call.1} parent=1 // pred_fallthru
      _
    // Predicated region
    $region38: #{tpu_custom_call.1} parent=1 // pred_check
      _
    $region39: #{tpu_custom_call.1} parent=1 // pred_check_branch
      %78 = sbr.rel (0) target = $region41
    $region40: #{tpu_custom_call.1} parent=1 // pred_region
      %79 = dma.done [#allocation6], 8192
    $region41: #{tpu_custom_call.1} parent=1 // pred_fallthru
      _
    // Predicated region
    $region42: #{tpu_custom_call.1} parent=1 // pred_check
      _
    $region43: #{tpu_custom_call.1} parent=1 // pred_check_branch
      %81 = sbr.rel (0) target = $region45
    $region44: #{tpu_custom_call.1} parent=1 // pred_region
      %82 = dma.done [#allocation9], 4096
    $region45: #{tpu_custom_call.1} parent=1 // pred_fallthru
      _
    %v83 = vld [vmem:[#allocation2] sm:$0xff]
    %v84 = vld [vmem:[#allocation5] sm:$0xff]
    %v85 = vld [vmem:[#allocation5 + $0x8] sm:$0xff]
    %v86 = vld [vmem:[#allocation5 + $0x10] sm:$0xff]
    %v87 = vld [vmem:[#allocation5 + $0x18] sm:$0xff]
    %v88 = vld [vmem:[#allocation5 + $0x20] sm:$0xff]
    %v89 = vld [vmem:[#allocation5 + $0x28] sm:$0xff]
    %v90 = vld [vmem:[#allocation5 + $0x30] sm:$0xff]
    %v91 = vld [vmem:[#allocation5 + $0x38] sm:$0xff]
    %v92 = vld [vmem:[%s2] sm:$0x3]
    %v94 = vlaneseq
    %v95 = vshrl.u32 %v94, 7
    %v96 = vsub.s32 0, %v95
    %v97 = vrot.slane %v92, %v96
    %v98 = vlaneseq
    %v99 = vshrl.u32 %v98, 7
    %v100 = vsub.s32 1, %v99
    %v101 = vrot.slane %v92, %v100
    %vm104 = vcmask 261120
    %v106 = vsel %vm104, %v83, 0
    %108 = vmatprep.subr.mxu0 %v85
    %109 = vmatpush1.msra.mxu0 %v84
    %110 = vmatprep.subr.mxu0 %v87
    %111 = vmatpush1.msra.mxu0 %v86
    %112 = vmatprep.subr.mxu0 %v89
    %113 = vmatpush1.msra.mxu0 %v88
    %114 = vmatprep.subr.mxu0 %v91
    %115 = vmatpush1.msra.mxu0 %v90
    %116 = vmatprep.subr.mxu0 0.0
    %117 = vmatpush1.msra.mxu0 0.0
    %118 = vmatprep.subr.mxu0 0.0
    %119 = vmatpush1.msra.mxu0 0.0
    %120 = vmatprep.subr.mxu0 0.0
    %121 = vmatpush1.msra.mxu0 0.0
    %122 = vmatprep.subr.mxu0 0.0
    %123 = vmatpush1.msra.mxu0 0.0
    %124 = vmatprep.subr.mxu0 0.0
    %125 = vmatpush1.msra.mxu0 0.0
    %126 = vmatprep.subr.mxu0 0.0
    %127 = vmatpush1.msra.mxu0 0.0
    %128 = vmatprep.subr.mxu0 0.0
    %129 = vmatpush1.msra.mxu0 0.0
    %130 = vmatprep.subr.mxu0 0.0
    %131 = vmatpush1.msra.mxu0 0.0
    %132 = vmatprep.subr.mxu0 0.0
    %133 = vmatpush1.msra.mxu0 0.0
    %134 = vmatprep.subr.mxu0 0.0
    %135 = vmatpush1.msra.mxu0 0.0
    %136 = vmatprep.subr.mxu0 0.0
    %137 = vmatpush1.msra.mxu0 0.0
    %138 = vmatprep.subr.mxu0 0.0
    %139 = vmatpush1.msra.mxu0 0.0
    %140 = vmatprep.subr.mxu0 0.0
    %141 = vmatpush1.msra.mxu0 0.0
    %142 = vmatprep.subr.mxu0 0.0
    %143 = vmatpush1.msra.mxu0 0.0
    %144 = vmatprep.subr.mxu0 0.0
    %145 = vmatpush1.msra.mxu0 0.0
    %146 = vmatprep.subr.mxu0 0.0
    %147 = vmatpush1.msra.mxu0 0.0
    %148 = vmatprep.subr.mxu0 0.0
    %149 = vmatpush1.msra.mxu0 0.0
    %150 = vmatprep.subr.mxu0 0.0
    %151 = vmatpush1.msra.mxu0 0.0
    %152 = vmatprep.subr.mxu0 0.0
    %153 = vmatpush1.msra.mxu0 0.0
    %154 = vmatprep.subr.mxu0 0.0
    %155 = vmatpush1.msra.mxu0 0.0
    %156 = vmatprep.subr.mxu0 0.0
    %157 = vmatpush1.msra.mxu0 0.0
    %158 = vmatprep.subr.mxu0 0.0
    %159 = vmatpush1.msra.mxu0 0.0
    %160 = vmatprep.subr.mxu0 0.0
    %161 = vmatpush1.msra.mxu0 0.0
    %162 = vmatprep.subr.mxu0 0.0
    %163 = vmatpush1.msra.mxu0 0.0
    %164 = vmatprep.subr.mxu0 0.0
    %165 = vmatpush1.msra.mxu0 0.0
    %166 = vmatprep.subr.mxu0 0.0
    %167 = vmatpush1.msra.mxu0 0.0
    %168 = vmatprep.subr.mxu0 0.0
    %169 = vmatpush1.msra.mxu0 0.0
    %170 = vmatprep.subr.mxu0 0.0
    %171 = vmatpush1.msra.mxu0 0.0
    %172 = vmatprep.mubr.f32.mxu0 0.0
    %173 = vmatmul.mubr.f32.gmra.mrb[0].mxu0 %v106
    %v174 = vpop.f32.mrb[0].mxu0
    %v175 = vadd.f32 %v97, %v174
    %v176 = vpop.f32.mrb[0].mxu0
    %v177 = vadd.f32 %v101, %v176
    %178 = vdwg.mxu0
    %v179 = vmax.f32 %v175, 0.0
    %v180 = vmax.f32 %v177, 0.0
    %v181 = vld [vmem:[#allocation7] sm:$0xff]
    %v182 = vld [vmem:[#allocation7 + $0x8] sm:$0xff]
    %v183 = vld [vmem:[#allocation7 + $0x10] sm:$0xff]
    %v184 = vld [vmem:[#allocation7 + $0x18] sm:$0xff]
    %v185 = vld [vmem:[#allocation7 + $0x20] sm:$0xff]
    %v186 = vld [vmem:[#allocation7 + $0x28] sm:$0xff]
    %v187 = vld [vmem:[#allocation7 + $0x30] sm:$0xff]
    %v188 = vld [vmem:[#allocation7 + $0x38] sm:$0xff]
    %v189 = vld [vmem:[#allocation7 + $0x40] sm:$0xff]
    %v190 = vld [vmem:[#allocation7 + $0x48] sm:$0xff]
    %v191 = vld [vmem:[#allocation7 + $0x50] sm:$0xff]
    %v192 = vld [vmem:[#allocation7 + $0x58] sm:$0xff]
    %v193 = vld [vmem:[#allocation7 + $0x60] sm:$0xff]
    %v194 = vld [vmem:[#allocation7 + $0x68] sm:$0xff]
    %v195 = vld [vmem:[#allocation7 + $0x70] sm:$0xff]
    %v196 = vld [vmem:[#allocation7 + $0x78] sm:$0xff]
    %v197 = vld [vmem:[#allocation7 + $0x80] sm:$0xff]
    %v198 = vld [vmem:[#allocation7 + $0x88] sm:$0xff]
    %v199 = vld [vmem:[#allocation7 + $0x90] sm:$0xff]
    %v200 = vld [vmem:[#allocation7 + $0x98] sm:$0xff]
    %v201 = vld [vmem:[#allocation7 + $0xa0] sm:$0xff]
    %v202 = vld [vmem:[#allocation7 + $0xa8] sm:$0xff]
    %v203 = vld [vmem:[#allocation7 + $0xb0] sm:$0xff]
    %v204 = vld [vmem:[#allocation7 + $0xb8] sm:$0xff]
    %v205 = vld [vmem:[#allocation7 + $0xc0] sm:$0xff]
    %v206 = vld [vmem:[#allocation7 + $0xc8] sm:$0xff]
    %v207 = vld [vmem:[#allocation7 + $0xd0] sm:$0xff]
    %v208 = vld [vmem:[#allocation7 + $0xd8] sm:$0xff]
    %v209 = vld [vmem:[#allocation7 + $0xe0] sm:$0xff]
    %v210 = vld [vmem:[#allocation7 + $0xe8] sm:$0xff]
    %v211 = vld [vmem:[#allocation7 + $0xf0] sm:$0xff]
    %v212 = vld [vmem:[#allocation7 + $0xf8] sm:$0xff]
    %v213 = vld [vmem:[#allocation7 + $0x100] sm:$0xff]
    %v214 = vld [vmem:[#allocation7 + $0x108] sm:$0xff]
    %v215 = vld [vmem:[#allocation7 + $0x110] sm:$0xff]
    %v216 = vld [vmem:[#allocation7 + $0x118] sm:$0xff]
    %v217 = vld [vmem:[#allocation7 + $0x120] sm:$0xff]
    %v218 = vld [vmem:[#allocation7 + $0x128] sm:$0xff]
    %v219 = vld [vmem:[#allocation7 + $0x130] sm:$0xff]
    %v220 = vld [vmem:[#allocation7 + $0x138] sm:$0xff]
    %v221 = vld [vmem:[#allocation7 + $0x140] sm:$0xff]
    %v222 = vld [vmem:[#allocation7 + $0x148] sm:$0xff]
    %v223 = vld [vmem:[#allocation7 + $0x150] sm:$0xff]
    %v224 = vld [vmem:[#allocation7 + $0x158] sm:$0xff]
    %v225 = vld [vmem:[#allocation7 + $0x160] sm:$0xff]
    %v226 = vld [vmem:[#allocation7 + $0x168] sm:$0xff]
    %v227 = vld [vmem:[#allocation7 + $0x170] sm:$0xff]
    %v228 = vld [vmem:[#allocation7 + $0x178] sm:$0xff]
    %v229 = vld [vmem:[#allocation7 + $0x180] sm:$0xff]
    %v230 = vld [vmem:[#allocation7 + $0x188] sm:$0xff]
    %v231 = vld [vmem:[#allocation7 + $0x190] sm:$0xff]
    %v232 = vld [vmem:[#allocation7 + $0x198] sm:$0xff]
    %v233 = vld [vmem:[#allocation7 + $0x1a0] sm:$0xff]
    %v234 = vld [vmem:[#allocation7 + $0x1a8] sm:$0xff]
    %v235 = vld [vmem:[#allocation7 + $0x1b0] sm:$0xff]
    %v236 = vld [vmem:[#allocation7 + $0x1b8] sm:$0xff]
    %v237 = vld [vmem:[#allocation7 + $0x1c0] sm:$0xff]
    %v238 = vld [vmem:[#allocation7 + $0x1c8] sm:$0xff]
    %v239 = vld [vmem:[#allocation7 + $0x1d0] sm:$0xff]
    %v240 = vld [vmem:[#allocation7 + $0x1d8] sm:$0xff]
    %v241 = vld [vmem:[#allocation7 + $0x1e0] sm:$0xff]
    %v242 = vld [vmem:[#allocation7 + $0x1e8] sm:$0xff]
    %v243 = vld [vmem:[#allocation7 + $0x1f0] sm:$0xff]
    %v244 = vld [vmem:[#allocation7 + $0x1f8] sm:$0xff]
    %v245 = vld [vmem:[%s4] sm:$0x3]
    %v247 = vlaneseq
    %v248 = vshrl.u32 %v247, 7
    %v249 = vsub.s32 0, %v248
    %v250 = vrot.slane %v245, %v249
    %v251 = vlaneseq
    %v252 = vshrl.u32 %v251, 7
    %v253 = vsub.s32 1, %v252
    %v254 = vrot.slane %v245, %v253
    %257 = vmatprep.subr.mxu0 %v182
    %258 = vmatpush1.msra.mxu0 %v181
    %259 = vmatprep.subr.mxu0 %v184
    %260 = vmatpush1.msra.mxu0 %v183
    %261 = vmatprep.subr.mxu0 %v186
    %262 = vmatpush1.msra.mxu0 %v185
    %263 = vmatprep.subr.mxu0 %v188
    %264 = vmatpush1.msra.mxu0 %v187
    %265 = vmatprep.subr.mxu0 %v190
    %266 = vmatpush1.msra.mxu0 %v189
    %267 = vmatprep.subr.mxu0 %v192
    %268 = vmatpush1.msra.mxu0 %v191
    %269 = vmatprep.subr.mxu0 %v194
    %270 = vmatpush1.msra.mxu0 %v193
    %271 = vmatprep.subr.mxu0 %v196
    %272 = vmatpush1.msra.mxu0 %v195
    %273 = vmatprep.subr.mxu0 %v198
    %274 = vmatpush1.msra.mxu0 %v197
    %275 = vmatprep.subr.mxu0 %v200
    %276 = vmatpush1.msra.mxu0 %v199
    %277 = vmatprep.subr.mxu0 %v202
    %278 = vmatpush1.msra.mxu0 %v201
    %279 = vmatprep.subr.mxu0 %v204
    %280 = vmatpush1.msra.mxu0 %v203
    %281 = vmatprep.subr.mxu0 %v206
    %282 = vmatpush1.msra.mxu0 %v205
    %283 = vmatprep.subr.mxu0 %v208
    %284 = vmatpush1.msra.mxu0 %v207
    %285 = vmatprep.subr.mxu0 %v210
    %286 = vmatpush1.msra.mxu0 %v209
    %287 = vmatprep.subr.mxu0 %v212
    %288 = vmatpush1.msra.mxu0 %v211
    %289 = vmatprep.subr.mxu0 %v214
    %290 = vmatpush1.msra.mxu0 %v213
    %291 = vmatprep.subr.mxu0 %v216
    %292 = vmatpush1.msra.mxu0 %v215
    %293 = vmatprep.subr.mxu0 %v218
    %294 = vmatpush1.msra.mxu0 %v217
    %295 = vmatprep.subr.mxu0 %v220
    %296 = vmatpush1.msra.mxu0 %v219
    %297 = vmatprep.subr.mxu0 %v222
    %298 = vmatpush1.msra.mxu0 %v221
    %299 = vmatprep.subr.mxu0 %v224
    %300 = vmatpush1.msra.mxu0 %v223
    %301 = vmatprep.subr.mxu0 %v226
    %302 = vmatpush1.msra.mxu0 %v225
    %303 = vmatprep.subr.mxu0 %v228
    %304 = vmatpush1.msra.mxu0 %v227
    %305 = vmatprep.subr.mxu0 %v230
    %306 = vmatpush1.msra.mxu0 %v229
    %307 = vmatprep.subr.mxu0 %v232
    %308 = vmatpush1.msra.mxu0 %v231
    %309 = vmatprep.subr.mxu0 %v234
    %310 = vmatpush1.msra.mxu0 %v233
    %311 = vmatprep.subr.mxu0 %v236
    %312 = vmatpush1.msra.mxu0 %v235
    %313 = vmatprep.subr.mxu0 %v238
    %314 = vmatpush1.msra.mxu0 %v237
    %315 = vmatprep.subr.mxu0 %v240
    %316 = vmatpush1.msra.mxu0 %v239
    %317 = vmatprep.subr.mxu0 %v242
    %318 = vmatpush1.msra.mxu0 %v241
    %319 = vmatprep.subr.mxu0 %v244
    %320 = vmatpush1.msra.mxu0 %v243
    %321 = vmatprep.mubr.f32.mxu0 %v180
    %322 = vmatmul.mubr.f32.gmra.mrb[0].mxu0 %v179
    %v323 = vpop.f32.mrb[0].mxu0
    %v324 = vadd.f32 %v250, %v323
    %v325 = vpop.f32.mrb[0].mxu0
    %v326 = vadd.f32 %v254, %v325
    %327 = vdwg.mxu0
    %v328 = vmax.f32 %v324, 0.0
    %v329 = vmax.f32 %v326, 0.0
    %v330 = vld [vmem:[#allocation8] sm:$0xff]
    %v331 = vld [vmem:[#allocation8 + $0x8] sm:$0xff]
    %v332 = vld [vmem:[#allocation8 + $0x10] sm:$0xff]
    %v333 = vld [vmem:[#allocation8 + $0x18] sm:$0xff]
    %v334 = vld [vmem:[#allocation8 + $0x20] sm:$0xff]
    %v335 = vld [vmem:[#allocation8 + $0x28] sm:$0xff]
    %v336 = vld [vmem:[#allocation8 + $0x30] sm:$0xff]
    %v337 = vld [vmem:[#allocation8 + $0x38] sm:$0xff]
    %v338 = vld [vmem:[#allocation8 + $0x40] sm:$0xff]
    %v339 = vld [vmem:[#allocation8 + $0x48] sm:$0xff]
    %v340 = vld [vmem:[#allocation8 + $0x50] sm:$0xff]
    %v341 = vld [vmem:[#allocation8 + $0x58] sm:$0xff]
    %v342 = vld [vmem:[#allocation8 + $0x60] sm:$0xff]
    %v343 = vld [vmem:[#allocation8 + $0x68] sm:$0xff]
    %v344 = vld [vmem:[#allocation8 + $0x70] sm:$0xff]
    %v345 = vld [vmem:[#allocation8 + $0x78] sm:$0xff]
    %v346 = vld [vmem:[#allocation8 + $0x80] sm:$0xff]
    %v347 = vld [vmem:[#allocation8 + $0x88] sm:$0xff]
    %v348 = vld [vmem:[#allocation8 + $0x90] sm:$0xff]
    %v349 = vld [vmem:[#allocation8 + $0x98] sm:$0xff]
    %v350 = vld [vmem:[#allocation8 + $0xa0] sm:$0xff]
    %v351 = vld [vmem:[#allocation8 + $0xa8] sm:$0xff]
    %v352 = vld [vmem:[#allocation8 + $0xb0] sm:$0xff]
    %v353 = vld [vmem:[#allocation8 + $0xb8] sm:$0xff]
    %v354 = vld [vmem:[#allocation8 + $0xc0] sm:$0xff]
    %v355 = vld [vmem:[#allocation8 + $0xc8] sm:$0xff]
    %v356 = vld [vmem:[#allocation8 + $0xd0] sm:$0xff]
    %v357 = vld [vmem:[#allocation8 + $0xd8] sm:$0xff]
    %v358 = vld [vmem:[#allocation8 + $0xe0] sm:$0xff]
    %v359 = vld [vmem:[#allocation8 + $0xe8] sm:$0xff]
    %v360 = vld [vmem:[#allocation8 + $0xf0] sm:$0xff]
    %v361 = vld [vmem:[#allocation8 + $0xf8] sm:$0xff]
    %v362 = vld [vmem:[%s6] sm:$0x1]
    %v364 = vlaneseq
    %v365 = vshrl.u32 %v364, 7
    %v366 = vsub.s32 0, %v365
    %v367 = vrot.slane %v362, %v366
    %369 = vmatprep.subr.mxu0 0.0
    %370 = vmatpush1.msra.mxu0 %v330
    %371 = vmatprep.subr.mxu0 0.0
    %372 = vmatpush1.msra.mxu0 %v331
    %373 = vmatprep.subr.mxu0 0.0
    %374 = vmatpush1.msra.mxu0 %v332
    %375 = vmatprep.subr.mxu0 0.0
    %376 = vmatpush1.msra.mxu0 %v333
    %377 = vmatprep.subr.mxu0 0.0
    %378 = vmatpush1.msra.mxu0 %v334
    %379 = vmatprep.subr.mxu0 0.0
    %380 = vmatpush1.msra.mxu0 %v335
    %381 = vmatprep.subr.mxu0 0.0
    %382 = vmatpush1.msra.mxu0 %v336
    %383 = vmatprep.subr.mxu0 0.0
    %384 = vmatpush1.msra.mxu0 %v337
    %385 = vmatprep.subr.mxu0 0.0
    %386 = vmatpush1.msra.mxu0 %v338
    %387 = vmatprep.subr.mxu0 0.0
    %388 = vmatpush1.msra.mxu0 %v339
    %389 = vmatprep.subr.mxu0 0.0
    %390 = vmatpush1.msra.mxu0 %v340
    %391 = vmatprep.subr.mxu0 0.0
    %392 = vmatpush1.msra.mxu0 %v341
    %393 = vmatprep.subr.mxu0 0.0
    %394 = vmatpush1.msra.mxu0 %v342
    %395 = vmatprep.subr.mxu0 0.0
    %396 = vmatpush1.msra.mxu0 %v343
    %397 = vmatprep.subr.mxu0 0.0
    %398 = vmatpush1.msra.mxu0 %v344
    %399 = vmatprep.subr.mxu0 0.0
    %400 = vmatpush1.msra.mxu0 %v345
    %401 = vmatprep.subr.mxu0 0.0
    %402 = vmatpush1.msra.mxu0 %v346
    %403 = vmatprep.subr.mxu0 0.0
    %404 = vmatpush1.msra.mxu0 %v347
    %405 = vmatprep.subr.mxu0 0.0
    %406 = vmatpush1.msra.mxu0 %v348
    %407 = vmatprep.subr.mxu0 0.0
    %408 = vmatpush1.msra.mxu0 %v349
    %409 = vmatprep.subr.mxu0 0.0
    %410 = vmatpush1.msra.mxu0 %v350
    %411 = vmatprep.subr.mxu0 0.0
    %412 = vmatpush1.msra.mxu0 %v351
    %413 = vmatprep.subr.mxu0 0.0
    %414 = vmatpush1.msra.mxu0 %v352
    %415 = vmatprep.subr.mxu0 0.0
    %416 = vmatpush1.msra.mxu0 %v353
    %417 = vmatprep.subr.mxu0 0.0
    %418 = vmatpush1.msra.mxu0 %v354
    %419 = vmatprep.subr.mxu0 0.0
    %420 = vmatpush1.msra.mxu0 %v355
    %421 = vmatprep.subr.mxu0 0.0
    %422 = vmatpush1.msra.mxu0 %v356
    %423 = vmatprep.subr.mxu0 0.0
    %424 = vmatpush1.msra.mxu0 %v357
    %425 = vmatprep.subr.mxu0 0.0
    %426 = vmatpush1.msra.mxu0 %v358
    %427 = vmatprep.subr.mxu0 0.0
    %428 = vmatpush1.msra.mxu0 %v359
    %429 = vmatprep.subr.mxu0 0.0
    %430 = vmatpush1.msra.mxu0 %v360
    %431 = vmatprep.subr.mxu0 0.0
    %432 = vmatpush1.msra.mxu0 %v361
    %433 = vmatprep.mubr.f32.mxu0 %v329
    %434 = vmatmul.mubr.f32.gmra.mrb[0].mxu0 %v328
    %v435 = vpop.f32.mrb[0].mxu0
    %v436 = vadd.f32 %v367, %v435
    %v437 = vpop.f32.mrb[0].mxu0
    %438 = vdwg.mxu0
    %v439 = vtanh.pop %v436
    %v440 = vmul.f32 %v439, 3.5
    %v441 = vadd.f32 %v440, -1.5
    %vm442 = vcmask 64512
    %443 = vst.msk [vmem:[#allocation10] sm:$0xff] %vm442, %v436
    %445 = vrot.lane.b32.xlu0 %v441, 120
    %v446 = vpop.permute.xlu0 %445
    %448 = vst.msk [vmem:[#allocation11] sm:$0xff] %vm442, %v446
    // Predicated region
    $region46: #{tpu_custom_call.1} parent=1 // pred_check
      _
    $region47: #{tpu_custom_call.1} parent=1 // pred_check_branch
      %450 = sbr.rel (0) target = $region49
    $region48: #{tpu_custom_call.1} parent=1 // pred_region
      %s452 = ssub.s32 128, 128
      %453 = vsyncadd [#allocation4], %s452
      %s455 = sshll.u32 [#allocation10], 4
      %s456 = int_to_ptr.vmem [resolvable:$true] %s455
      %458 = dma.vmem_to_hbm [thread:$0]  %s456, 128, %s7, [#allocation4]
    $region49: #{tpu_custom_call.1} parent=1 // pred_fallthru
      _
    // Predicated region
    $region50: #{tpu_custom_call.1} parent=1 // pred_check
      _
    $region51: #{tpu_custom_call.1} parent=1 // pred_check_branch
      %460 = sbr.rel (0) target = $region53
    $region52: #{tpu_custom_call.1} parent=1 // pred_region
      %s462 = ssub.s32 128, 128
      %463 = vsyncadd [#allocation12], %s462
      %s465 = sshll.u32 [#allocation11], 4
      %s466 = int_to_ptr.vmem [resolvable:$true] %s465
      %468 = dma.vmem_to_hbm [thread:$0]  %s466, 128, %s8, [#allocation12]
    $region53: #{tpu_custom_call.1} parent=1 // pred_fallthru
      _
    // Predicated region
    $region54: #{tpu_custom_call.1} parent=1 // pred_check
      _
    $region55: #{tpu_custom_call.1} parent=1 // pred_check_branch
      %470 = sbr.rel (0) target = $region57
    $region56: #{tpu_custom_call.1} parent=1 // pred_region
      %471 = dma.done [#allocation4], 128
    $region57: #{tpu_custom_call.1} parent=1 // pred_fallthru
      _
    // Predicated region
    $region58: #{tpu_custom_call.1} parent=1 // pred_check
      _
    $region59: #{tpu_custom_call.1} parent=1 // pred_check_branch
      %473 = sbr.rel (0) target = $region61
    $region60: #{tpu_custom_call.1} parent=1 // pred_region
      %474 = dma.done [#allocation12], 128
    $region61: #{tpu_custom_call.1} parent=1 // pred_fallthru
      _
    %475 = vsyncpa [#allocation3], 1
    %476 = vsyncpa [#allocation6], 1
    %477 = vsyncpa [#allocation9], 1
    %478 = vsyncpa [#allocation4], 1
    %479 = vsyncpa [#allocation12], 1

</llo_original>
